<compile_context>
chip_gen: v7x
topology: tpu7x:2x2x1
jax: 0.10.0
libtpu: 0.0.40
codegen_flags: <defaults>
</compile_context>

<pallas_src>
import jax
import jax.numpy as jnp
from jax import lax
from jax.experimental import pallas as pl
from jax.experimental.pallas import tpu as pltpu


def _min_sublanes(dtype) -> int:
    # f32 -> 8, bf16 -> 16, int8/fp8 -> 32 (min second-to-last tile dim).
    return max(8, 32 // jnp.dtype(dtype).itemsize)


def _gather_resident_kernel(idx_ref, emb_ref, out_ref):
    """Table resident in VMEM; gather TB rows into a dense (TB, D) tile."""
    tb = out_ref.shape[0]
    base = pl.program_id(0) * tb

    def body(r, carry):
        row = idx_ref[base + r]                       # scalar read from SMEM
        out_ref[pl.ds(r, 1), :] = emb_ref[pl.ds(row, 1), :]
        return carry

    lax.fori_loop(0, tb, body, 0, unroll=8)


def _gather_dma_kernel(idx_ref, w_hbm, out_ref, buf_ref, sem_ref):
    """Table stays in HBM; double-buffered batched row DMAs (pattern P4)."""
    i = pl.program_id(0)
    n_steps = pl.num_programs(0)
    tb = out_ref.shape[0]

    def issue_tile(tile, slot):
        base = tile * tb

        @pl.loop(0, tb)
        def _(r):
            row = idx_ref[base + r]
            pltpu.make_async_copy(
                w_hbm.at[pl.ds(row, 1)],              # (1, D) row in HBM
                buf_ref.at[slot, pl.ds(r, 1)],        # (1, D) row of the slot
                sem_ref.at[slot],
            ).start()

    # Prime the pipeline on the first step.
    @pl.when(i == 0)
    def _():
        issue_tile(0, 0)

    slot = i % 2

    # Prefetch next tile's rows into the other slot while this tile drains.
    @pl.when(i + 1 < n_steps)
    def _():
        issue_tile(i + 1, 1 - slot)

    # Wait for all TB row copies of the current tile: the DMA semaphore counts
    # bytes, so one wait sized to the whole (TB, D) slot covers all of them.
    pltpu.make_async_copy(buf_ref.at[slot], buf_ref.at[slot],
                          sem_ref.at[slot]).wait()
    out_ref[...] = buf_ref[slot]


def glo_table_forward(weight: jax.Array, idx, *, tile_b: int = 256,
                      force_dma: bool = False,
                      vmem_budget_bytes: int | None = None) -> jax.Array:
    """Pallas equivalent of GLOTable.forward: self.embeddings(idx)."""
    scalar_input = isinstance(idx, int)
    if scalar_input:
        idx_arr = jnp.asarray([idx], dtype=jnp.int32)
        out_batch_shape = ()
    else:
        idx_in = jnp.asarray(idx, dtype=jnp.int32)
        out_batch_shape = idx_in.shape
        idx_arr = idx_in.reshape(-1)

    n, d = weight.shape
    b = idx_arr.shape[0]
    itemsize = jnp.dtype(weight.dtype).itemsize

    # torch.nn.Embedding raises on out-of-range indices; clamp for TPU safety.
    idx_arr = jnp.clip(idx_arr, 0, n - 1)

    # Lane-dense feature dim: pad D up to a multiple of 128.
    d_pad = pl.cdiv(d, 128) * 128
    w_pad = weight if d_pad == d else jnp.pad(weight, ((0, 0), (0, d_pad - d)))

    # Batch tile: multiple of the dtype's min sublane count, capped at tile_b.
    sub = _min_sublanes(weight.dtype)
    b_min = pl.cdiv(b, sub) * sub
    tb = min(max(tile_b, sub), b_min)
    tb = pl.cdiv(tb, sub) * sub
    n_tiles = pl.cdiv(b, tb)
    b_pad = n_tiles * tb
    if b_pad != b:
        idx_arr = jnp.pad(idx_arr, (0, b_pad - b))    # pad rows are valid (0)

    table_bytes = n * d_pad * itemsize
    out_tile_bytes = tb * d_pad * itemsize

    # Per-generation VMEM budget (v7x: 64 MiB physical vs 128 MiB v5e/v6e).
    try:
        info = pltpu.get_tpu_info()
        vmem_cap = int(getattr(info, "vmem_capacity_bytes", 0)) or (64 << 20)
    except Exception:
        vmem_cap = 64 << 20                           # conservative fallback
    if vmem_budget_bytes is None:
        vmem_budget_bytes = int(vmem_cap) * 3 // 4

    # Table (possibly double-buffered) + double-buffered output tiles + slack.
    resident_vmem = 2 * table_bytes + 2 * out_tile_bytes + (2 << 20)
    use_resident = (not force_dma) and (resident_vmem <= vmem_budget_bytes)

    bytes_accessed = int(table_bytes + 2 * b_pad * d_pad * itemsize + b_pad * 4)
    cost = pl.CostEstimate(flops=0, transcendentals=0,
                           bytes_accessed=bytes_accessed)

    out_spec = pl.BlockSpec((tb, d_pad), lambda i, idx_ref: (i, 0))
    out_shape = jax.ShapeDtypeStruct((b_pad, d_pad), weight.dtype)

    if use_resident:
        vmem_limit = None
        if resident_vmem > (24 << 20):
            vmem_limit = int(min(vmem_budget_bytes, resident_vmem + (4 << 20)))
        out = pl.pallas_call(
            _gather_resident_kernel,
            out_shape=out_shape,
            grid_spec=pltpu.PrefetchScalarGridSpec(
                num_scalar_prefetch=1,                # idx -> SMEM
                grid=(n_tiles,),
                in_specs=[
                    # Full-array block with constant index_map: the table is
                    # DMA'd to VMEM once and stays resident across the grid.
                    pl.BlockSpec((n, d_pad), lambda i, idx_ref: (0, 0)),
                ],
                out_specs=out_spec,
            ),
            compiler_params=pltpu.CompilerParams(
                dimension_semantics=("parallel",),
                vmem_limit_bytes=vmem_limit),
            cost_estimate=cost,
        )(idx_arr, w_pad)
    else:
        out = pl.pallas_call(
            _gather_dma_kernel,
            out_shape=out_shape,
            grid_spec=pltpu.PrefetchScalarGridSpec(
                num_scalar_prefetch=1,
                grid=(n_tiles,),
                in_specs=[pl.BlockSpec(memory_space=pl.ANY)],  # table in HBM
                out_specs=out_spec,
                scratch_shapes=[
                    pltpu.VMEM((2, tb, d_pad), weight.dtype),  # double buffer
                    pltpu.SemaphoreType.DMA((2,)),
                ],
            ),
            compiler_params=pltpu.CompilerParams(
                # double-buffer state carried across steps -> sequential grid
                dimension_semantics=("arbitrary",)),
            cost_estimate=cost,
        )(idx_arr, w_pad)

    out = out[:b, :d]
    return out.reshape(out_batch_shape + (d,))


if __name__ == "__main__":
    # GLOTable(n, glo_features): nn.Embedding weight of shape (n, glo_features).
    # __init__ zero-initializes the table; here we use deterministic random
    # values from PRNGKey(0) so the gather is observable/verifiable.
    k_w, k_idx, k_w2 = jax.random.split(jax.random.PRNGKey(0), 3)

    n, glo_features = 16, 128
    weight = jax.random.normal(k_w, (n, glo_features), dtype=jnp.float32)

    # (B,) tensor index path -> (B, glo_features)
    idx = jnp.array([3, 0, 7, 7, 12, 1, 15, 4], dtype=jnp.int32)
    out = jax.block_until_ready(glo_table_forward(weight, idx))
    ref = jnp.take(weight, idx, axis=0)
    assert out.shape == (idx.shape[0], glo_features) and out.dtype == weight.dtype
    assert jnp.allclose(out, ref), "mismatch vs reference gather (resident path)"

    # int index path -> (glo_features,)
    out_scalar = jax.block_until_ready(glo_table_forward(weight, 5))
    assert out_scalar.shape == (glo_features,)
    assert jnp.allclose(out_scalar, weight[5])

    # Multi-tile batch: VMEM-resident path and the manual double-buffered DMA
    # fallback (used when the table would not fit VMEM), forced here on a
    # small table so both code paths are verified.
    idx_big = jax.random.randint(k_idx, (20,), 0, n, dtype=jnp.int32)
    ref_big = jnp.take(weight, idx_big, axis=0)
    out_res = jax.block_until_ready(glo_table_forward(weight, idx_big, tile_b=8))
    assert jnp.allclose(out_res, ref_big), "mismatch (multi-tile resident path)"
    out_dma = jax.block_until_ready(
        glo_table_forward(weight, idx_big, tile_b=8, force_dma=True))
    assert jnp.allclose(out_dma, ref_big), "mismatch (manual DMA path)"

    # Non-lane-aligned feature dim (padded to 128 internally) and a 2-D index
    # tensor: output keeps idx.shape + (glo_features,), like nn.Embedding.
    n2, d2 = 10, 40
    weight2 = jax.random.normal(k_w2, (n2, d2), dtype=jnp.float32)
    idx2 = jnp.array([[0, 9, 3], [7, 7, 2]], dtype=jnp.int32)
    ref2 = jnp.take(weight2, idx2.reshape(-1), axis=0).reshape(2, 3, d2)
    out2 = jax.block_until_ready(glo_table_forward(weight2, idx2))
    assert out2.shape == (2, 3, d2)
    assert jnp.allclose(out2, ref2), "mismatch (padded-D / 2-D idx path)"
    out2_dma = jax.block_until_ready(
        glo_table_forward(weight2, idx2, force_dma=True))
    assert jnp.allclose(out2_dma, ref2), "mismatch (padded-D manual DMA path)"

    # TODO(synk): GLOTable.interpolated / optimizer / schedule are training-time
    # utilities, not part of forward(); not implemented as kernels.

    print("KERNEL_OK")
</pallas_src>

<mosaic_0001>
module attributes {stable_mosaic.version = 11 : i64} {
  func.func @_gather_resident_kernel(%arg0: i32, %arg1: memref<8xi32, #tpu.memory_space<smem>>, %arg2: memref<16x128xf32, #tpu.memory_space<vmem>>, %arg3: memref<8x128xf32, #tpu.memory_space<vmem>>) attributes {dimension_semantics = [#tpu.dimension_semantics<parallel>], iteration_bounds = array<i64: 1>, scalar_prefetch = 1 : i64, scratch_operands = 0 : i64, tpu.core_type = #tpu.core_type<tc>, window_params = [{pipeline_mode = #tpu.pipeline_mode<synchronous>, transform_indices = @transform_0, window_bounds = array<i64: 16, 128>}, {transform_indices = @transform_1, window_bounds = array<i64: 8, 128>}]} {
    %c8_i32 = arith.constant 8 : i32
    %0 = arith.muli %arg0, %c8_i32 : i32
    %c0_i32 = arith.constant 0 : i32
    %1 = arith.addi %0, %c0_i32 : i32
    %2 = arith.index_cast %1 : i32 to index
    %3 = memref.load %arg1[%2] : memref<8xi32, #tpu.memory_space<smem>>
    %4 = arith.index_cast %3 : i32 to index
    %c0 = arith.constant 0 : index
    %5 = vector.load %arg2[%4, %c0] : memref<16x128xf32, #tpu.memory_space<vmem>>, vector<1x128xf32>
    %6 = arith.index_cast %c0_i32 : i32 to index
    %c0_0 = arith.constant 0 : index
    %7 = vector.load %arg3[%6, %c0_0] : memref<8x128xf32, #tpu.memory_space<vmem>>, vector<1x128xf32>
    tpu.vector_store %arg3[%6, %c0_0], %5 {strides = array<i32>} : memref<8x128xf32, #tpu.memory_space<vmem>>, vector<1x128xf32>,
    %c1_i32 = arith.constant 1 : i32
    %8 = arith.addi %0, %c1_i32 : i32
    %9 = arith.index_cast %8 : i32 to index
    %10 = memref.load %arg1[%9] : memref<8xi32, #tpu.memory_space<smem>>
    %11 = arith.index_cast %10 : i32 to index
    %c0_1 = arith.constant 0 : index
    %12 = vector.load %arg2[%11, %c0_1] : memref<16x128xf32, #tpu.memory_space<vmem>>, vector<1x128xf32>
    %13 = arith.index_cast %c1_i32 : i32 to index
    %c0_2 = arith.constant 0 : index
    %14 = vector.load %arg3[%13, %c0_2] : memref<8x128xf32, #tpu.memory_space<vmem>>, vector<1x128xf32>
    tpu.vector_store %arg3[%13, %c0_2], %12 {strides = array<i32>} : memref<8x128xf32, #tpu.memory_space<vmem>>, vector<1x128xf32>,
    %c2_i32 = arith.constant 2 : i32
    %15 = arith.addi %0, %c2_i32 : i32
    %16 = arith.index_cast %15 : i32 to index
    %17 = memref.load %arg1[%16] : memref<8xi32, #tpu.memory_space<smem>>
    %18 = arith.index_cast %17 : i32 to index
    %c0_3 = arith.constant 0 : index
    %19 = vector.load %arg2[%18, %c0_3] : memref<16x128xf32, #tpu.memory_space<vmem>>, vector<1x128xf32>
    %20 = arith.index_cast %c2_i32 : i32 to index
    %c0_4 = arith.constant 0 : index
    %21 = vector.load %arg3[%20, %c0_4] : memref<8x128xf32, #tpu.memory_space<vmem>>, vector<1x128xf32>
    tpu.vector_store %arg3[%20, %c0_4], %19 {strides = array<i32>} : memref<8x128xf32, #tpu.memory_space<vmem>>, vector<1x128xf32>,
    %c3_i32 = arith.constant 3 : i32
    %22 = arith.addi %0, %c3_i32 : i32
    %23 = arith.index_cast %22 : i32 to index
    %24 = memref.load %arg1[%23] : memref<8xi32, #tpu.memory_space<smem>>
    %25 = arith.index_cast %24 : i32 to index
    %c0_5 = arith.constant 0 : index
    %26 = vector.load %arg2[%25, %c0_5] : memref<16x128xf32, #tpu.memory_space<vmem>>, vector<1x128xf32>
    %27 = arith.index_cast %c3_i32 : i32 to index
    %c0_6 = arith.constant 0 : index
    %28 = vector.load %arg3[%27, %c0_6] : memref<8x128xf32, #tpu.memory_space<vmem>>, vector<1x128xf32>
    tpu.vector_store %arg3[%27, %c0_6], %26 {strides = array<i32>} : memref<8x128xf32, #tpu.memory_space<vmem>>, vector<1x128xf32>,
    %c4_i32 = arith.constant 4 : i32
    %29 = arith.addi %0, %c4_i32 : i32
    %30 = arith.index_cast %29 : i32 to index
    %31 = memref.load %arg1[%30] : memref<8xi32, #tpu.memory_space<smem>>
    %32 = arith.index_cast %31 : i32 to index
    %c0_7 = arith.constant 0 : index
    %33 = vector.load %arg2[%32, %c0_7] : memref<16x128xf32, #tpu.memory_space<vmem>>, vector<1x128xf32>
    %34 = arith.index_cast %c4_i32 : i32 to index
    %c0_8 = arith.constant 0 : index
    %35 = vector.load %arg3[%34, %c0_8] : memref<8x128xf32, #tpu.memory_space<vmem>>, vector<1x128xf32>
    tpu.vector_store %arg3[%34, %c0_8], %33 {strides = array<i32>} : memref<8x128xf32, #tpu.memory_space<vmem>>, vector<1x128xf32>,
    %c5_i32 = arith.constant 5 : i32
    %36 = arith.addi %0, %c5_i32 : i32
    %37 = arith.index_cast %36 : i32 to index
    %38 = memref.load %arg1[%37] : memref<8xi32, #tpu.memory_space<smem>>
    %39 = arith.index_cast %38 : i32 to index
    %c0_9 = arith.constant 0 : index
    %40 = vector.load %arg2[%39, %c0_9] : memref<16x128xf32, #tpu.memory_space<vmem>>, vector<1x128xf32>
    %41 = arith.index_cast %c5_i32 : i32 to index
    %c0_10 = arith.constant 0 : index
    %42 = vector.load %arg3[%41, %c0_10] : memref<8x128xf32, #tpu.memory_space<vmem>>, vector<1x128xf32>
    tpu.vector_store %arg3[%41, %c0_10], %40 {strides = array<i32>} : memref<8x128xf32, #tpu.memory_space<vmem>>, vector<1x128xf32>,
    %c6_i32 = arith.constant 6 : i32
    %43 = arith.addi %0, %c6_i32 : i32
    %44 = arith.index_cast %43 : i32 to index
    %45 = memref.load %arg1[%44] : memref<8xi32, #tpu.memory_space<smem>>
    %46 = arith.index_cast %45 : i32 to index
    %c0_11 = arith.constant 0 : index
    %47 = vector.load %arg2[%46, %c0_11] : memref<16x128xf32, #tpu.memory_space<vmem>>, vector<1x128xf32>
    %48 = arith.index_cast %c6_i32 : i32 to index
    %c0_12 = arith.constant 0 : index
    %49 = vector.load %arg3[%48, %c0_12] : memref<8x128xf32, #tpu.memory_space<vmem>>, vector<1x128xf32>
    tpu.vector_store %arg3[%48, %c0_12], %47 {strides = array<i32>} : memref<8x128xf32, #tpu.memory_space<vmem>>, vector<1x128xf32>,
    %c7_i32 = arith.constant 7 : i32
    %50 = arith.addi %0, %c7_i32 : i32
    %51 = arith.index_cast %50 : i32 to index
    %52 = memref.load %arg1[%51] : memref<8xi32, #tpu.memory_space<smem>>
    %53 = arith.index_cast %52 : i32 to index
    %c0_13 = arith.constant 0 : index
    %54 = vector.load %arg2[%53, %c0_13] : memref<16x128xf32, #tpu.memory_space<vmem>>, vector<1x128xf32>
    %55 = arith.index_cast %c7_i32 : i32 to index
    %c0_14 = arith.constant 0 : index
    %56 = vector.load %arg3[%55, %c0_14] : memref<8x128xf32, #tpu.memory_space<vmem>>, vector<1x128xf32>
    tpu.vector_store %arg3[%55, %c0_14], %54 {strides = array<i32>} : memref<8x128xf32, #tpu.memory_space<vmem>>, vector<1x128xf32>,
    %c8_i32_15 = arith.constant 8 : i32
    return
  }
  func.func @transform_0(%arg0: i32, %arg1: memref<8xi32, #tpu.memory_space<smem>>) -> (i32, i32) {
    %c0_i32 = arith.constant 0 : i32
    %c0_i32_0 = arith.constant 0 : i32
    %c0_i32_1 = arith.constant 0 : i32
    return %c0_i32, %c0_i32_0 : i32, i32
  }
  func.func @transform_1(%arg0: i32, %arg1: memref<8xi32, #tpu.memory_space<smem>>) -> (i32, i32) {
    %c0_i32 = arith.constant 0 : i32
    %c0_i32_0 = arith.constant 0 : i32
    return %arg0, %c0_i32 : i32, i32
  }
}

</mosaic_0001>

<llo_original>
// kernel: tpu_custom_call.1
$region0: #{tpu_custom_call.1}
  #allocation0 [shape = 'u32[]', space=smem, size = 0x4, offset = 0x4, fixed_abs, tag = 'smem constant byte address 0x4 - core index']
  #allocation1 [shape = 'u32[144,128]{1,0:T(1,128)}', space=vmem, size = 0x12000, scoped, tag = 'internal scratch']
  #allocation2 [shape = 's32[1]{0}', space=sflag, size = 0x4, scoped, tag = 'scoped memory for tpu_custom_call.1']
  #allocation3 [shape = 'u8[512]{0}', space=smem, size = 0x200, scoped, tag = 'prefetched SMEM operand 0']
  %s0 = inlined_call_operand.hbm [shape: s32[8], index: 0, kind: input, shape index: {}]
  %s1 = inlined_call_operand.hbm [shape: f32[16,128], index: 1, kind: input, shape index: {}]
  %s2 = inlined_call_operand.hbm [shape: f32[8,128], index: 2, kind: output, shape index: {}]
  %s3 = sld [smem:[#allocation0]]
  $region18: #{tpu_custom_call.1} parent=0
    _
  %s5 = ssub.s32 1, %s3
  %s6 = scalar_select 0, %s5, %s3
  %8 = dma.hbm_to_smem %s0, 16, [#allocation3], [#allocation2]
  %9 = dma.done [#allocation2], 16
  %10 = sfence
  $region1: #{tpu_custom_call.1} parent=0
    #allocation4 [shape = 'u8[8192]{0}', space=vmem, size = 0x2000, scoped, tag = 'input window, operand 1, single buffered']
    #allocation5 [shape = 's32[1]{0}', space=sflag, size = 0x4, scoped, tag = 'scoped memory for tpu_custom_call.1']
    #allocation6 [shape = 's32[1]{0}', space=sflag, size = 0x4, scoped, tag = 'scoped memory for tpu_custom_call.1']
    #allocation7 [shape = 'u8[4096]{0}', space=vmem, size = 0x1000, scoped, tag = 'output window, operand 0, single buffered']
    %11 = vsyncpa [#allocation5], 0
    %12 = vsyncpa [#allocation6], 0
    // Predicated region
    $region2: #{tpu_custom_call.1} parent=1 // pred_check
      _
    $region3: #{tpu_custom_call.1} parent=1 // pred_check_branch
      %14 = sbr.rel (0) target = $region5
    $region4: #{tpu_custom_call.1} parent=1 // pred_region
      %s16 = ssub.s32 256, 256
      %17 = vsyncadd [#allocation5], %s16
      %s18 = sshll.u32 [#allocation4], 4
      %s19 = int_to_ptr.vmem [resolvable:$true] %s18
      %24 = dma.hbm_to_vmem [thread:$0]  %s1, 256, %s19, [#allocation5], 128, 128, 8
    $region5: #{tpu_custom_call.1} parent=1 // pred_fallthru
      _
    // Predicated region
    $region6: #{tpu_custom_call.1} parent=1 // pred_check
      _
    $region7: #{tpu_custom_call.1} parent=1 // pred_check_branch
      %26 = sbr.rel (0) target = $region9
    $region8: #{tpu_custom_call.1} parent=1 // pred_region
      %27 = dma.done [#allocation5], 256
    $region9: #{tpu_custom_call.1} parent=1 // pred_fallthru
      _
    %s28 = smul.u32 0, 8
    %s29 = sld [smem:[#allocation3 + %s28]]
    %s30 = scalar_lea.vmem [#allocation4], %s29
    %v31 = vld [vmem:[%s30] sm:$0x1]
    %32 = vst [vmem:[#allocation7] sm:$0x1] %v31
    %s33 = sadd.s32 %s28, 1
    %s34 = sld [smem:[#allocation3 + %s33]]
    %s35 = scalar_lea.vmem [#allocation4], %s34
    %v36 = vld [vmem:[%s35] sm:$0x1]
    %37 = vst [vmem:[#allocation7 + $0x1] sm:$0x1] %v36
    %s38 = sadd.s32 %s28, 2
    %s39 = sld [smem:[#allocation3 + %s38]]
    %s40 = scalar_lea.vmem [#allocation4], %s39
    %v41 = vld [vmem:[%s40] sm:$0x1]
    %42 = vst [vmem:[#allocation7 + $0x2] sm:$0x1] %v41
    %s43 = sadd.s32 %s28, 3
    %s44 = sld [smem:[#allocation3 + %s43]]
    %s45 = scalar_lea.vmem [#allocation4], %s44
    %v46 = vld [vmem:[%s45] sm:$0x1]
    %47 = vst [vmem:[#allocation7 + $0x3] sm:$0x1] %v46
    %s48 = sadd.s32 %s28, 4
    %s49 = sld [smem:[#allocation3 + %s48]]
    %s50 = scalar_lea.vmem [#allocation4], %s49
    %v51 = vld [vmem:[%s50] sm:$0x1]
    %52 = vst [vmem:[#allocation7 + $0x4] sm:$0x1] %v51
    %s53 = sadd.s32 %s28, 5
    %s54 = sld [smem:[#allocation3 + %s53]]
    %s55 = scalar_lea.vmem [#allocation4], %s54
    %v56 = vld [vmem:[%s55] sm:$0x1]
    %57 = vst [vmem:[#allocation7 + $0x5] sm:$0x1] %v56
    %s58 = sadd.s32 %s28, 6
    %s59 = sld [smem:[#allocation3 + %s58]]
    %s60 = scalar_lea.vmem [#allocation4], %s59
    %v61 = vld [vmem:[%s60] sm:$0x1]
    %62 = vst [vmem:[#allocation7 + $0x6] sm:$0x1] %v61
    %s63 = sadd.s32 %s28, 7
    %s64 = sld [smem:[#allocation3 + %s63]]
    %s65 = scalar_lea.vmem [#allocation4], %s64
    %v66 = vld [vmem:[%s65] sm:$0x1]
    %67 = vst [vmem:[#allocation7 + $0x7] sm:$0x1] %v66
    // Predicated region
    $region10: #{tpu_custom_call.1} parent=1 // pred_check
      _
    $region11: #{tpu_custom_call.1} parent=1 // pred_check_branch
      %69 = sbr.rel (0) target = $region13
    $region12: #{tpu_custom_call.1} parent=1 // pred_region
      %s71 = ssub.s32 128, 128
      %72 = vsyncadd [#allocation6], %s71
      %s74 = sshll.u32 [#allocation7], 4
      %s75 = int_to_ptr.vmem [resolvable:$true] %s74
      %77 = dma.vmem_to_hbm [thread:$0]  %s75, 128, %s2, [#allocation6]
    $region13: #{tpu_custom_call.1} parent=1 // pred_fallthru
      _
    // Predicated region
    $region14: #{tpu_custom_call.1} parent=1 // pred_check
      _
    $region15: #{tpu_custom_call.1} parent=1 // pred_check_branch
      %79 = sbr.rel (0) target = $region17
    $region16: #{tpu_custom_call.1} parent=1 // pred_region
      %80 = dma.done [#allocation6], 128
    $region17: #{tpu_custom_call.1} parent=1 // pred_fallthru
      _
    %81 = vsyncpa [#allocation5], 1
    %82 = vsyncpa [#allocation6], 1

</llo_original>
